<compile_context>
chip_gen: v5e
topology: v5e:2x2
jax: 0.10.0
libtpu: 0.0.40
codegen_flags: <defaults>
</compile_context>

<pallas_src>
import jax
import jax.numpy as jnp
from jax.experimental import pallas as pl
from jax.experimental.pallas import tpu as pltpu


def _mi_latent_kernel(z_ref, wmu_ref, wlv_ref, eps_ref, out_ref):
    z = z_ref[...]                                            # (tb, nz)

    # self.linear(z).chunk(2, -1) realized as two lane-aligned MXU passes.
    mu = jnp.dot(z, wmu_ref[...], preferred_element_type=jnp.float32)
    logvar = jnp.dot(z, wlv_ref[...], preferred_element_type=jnp.float32)

    # reparameterize (nsamples=1): std = exp(0.5*logvar); latent = mu + eps*std
    std = jnp.exp(0.5 * logvar)                               # EUP
    out_ref[...] = (mu + eps_ref[...] * std).astype(out_ref.dtype)


def prepare_mi_params(w):
    """One-time parameter prep (do NOT call per forward step).

    w: (2*nz, nz) float32 -- PyTorch nn.Linear(nz, 2*nz, bias=False) weight.
    Returns (w_mu_t, w_logvar_t), each (nz, nz), pre-transposed so the kernel
    contracts z @ w_half without any per-call transpose op.
    """
    w = jnp.asarray(w, jnp.float32)
    nz = w.shape[1]
    w_mu_t = w[:nz, :].T          # (nz, nz)
    w_lv_t = w[nz:, :].T          # (nz, nz)
    return w_mu_t, w_lv_t


def _pick_batch_tile(B):
    # Full-array block when B is small / not a multiple of 8 (allowed since
    # block_shape == full dims); otherwise the largest power-of-two multiple
    # of 8 dividing B, capped at 256 rows.
    if B % 8 != 0 or B <= 8:
        return B
    tb = 8
    while tb * 2 <= min(B, 256) and B % (tb * 2) == 0:
        tb *= 2
    return tb


def mi_network_forward(z, w_mu_t, w_lv_t, eps, cond_pooled_hidden_fea):
    """MI_Network.forward up to (and excluding) the external decoder call.

    z:                       (B, nz) float32
    w_mu_t, w_lv_t:          (nz, nz) float32  (from prepare_mi_params)
    eps:                     (B, nz) float32   N(0,1) reparameterization noise
    cond_pooled_hidden_fea:  (B, H)  float32
    Returns `past` = concat([cond_pooled_hidden_fea, latent_z], axis=1).
    """
    B, nz = z.shape
    tb = _pick_batch_tile(B)
    grid = (B // tb,)

    latent = pl.pallas_call(
        _mi_latent_kernel,
        out_shape=jax.ShapeDtypeStruct((B, nz), jnp.float32),
        grid_spec=pltpu.PrefetchScalarGridSpec(
            num_scalar_prefetch=0,
            grid=grid,
            in_specs=[
                pl.BlockSpec((tb, nz), lambda i: (i, 0)),   # z
                pl.BlockSpec((nz, nz), lambda i: (0, 0)),   # w_mu_t (resident)
                pl.BlockSpec((nz, nz), lambda i: (0, 0)),   # w_lv_t (resident)
                pl.BlockSpec((tb, nz), lambda i: (i, 0)),   # eps
            ],
            out_specs=pl.BlockSpec((tb, nz), lambda i: (i, 0)),
        ),
        compiler_params=pltpu.CompilerParams(
            dimension_semantics=("parallel",)),
    )(z.astype(jnp.float32), w_mu_t, w_lv_t, eps.astype(jnp.float32))

    # torch.cat([condition_pooled_hidden_fea, latent_z], 1): pure data movement,
    # left to XLA so it fuses with the decoder's input projection downstream.
    past = jnp.concatenate(
        [cond_pooled_hidden_fea.astype(jnp.float32), latent], axis=1)
    return past


def _reference(z, w, eps, cond):
    proj = z @ w.T
    nz = z.shape[-1]
    mu, logvar = proj[:, :nz], proj[:, nz:]
    latent = mu + eps * jnp.exp(0.5 * logvar)
    return jnp.concatenate([cond, latent], axis=1)


if __name__ == "__main__":
    NZ, H = 32, 64
    key = jax.random.PRNGKey(0)
    k_z, k_w, k_eps, k_cond, k_z2, k_eps2, k_cond2 = jax.random.split(key, 7)

    # nn.Linear(nz, 2*nz, bias=False) default init: U(-1/sqrt(nz), 1/sqrt(nz))
    bound = 1.0 / (NZ ** 0.5)
    w = jax.random.uniform(k_w, (2 * NZ, NZ), jnp.float32, -bound, bound)
    w_mu_t, w_lv_t = prepare_mi_params(w)   # one-time prep, not per call

    # Case 1: B=1 -- the shape the original module's squeeze(0)+cat(...,1) implies.
    B1 = 1
    z1 = jax.random.normal(k_z, (B1, NZ), jnp.float32)
    eps1 = jax.random.normal(k_eps, (B1, NZ), jnp.float32)
    cond1 = jax.random.normal(k_cond, (B1, H), jnp.float32)
    out1 = jax.block_until_ready(mi_network_forward(z1, w_mu_t, w_lv_t, eps1, cond1))
    ref1 = _reference(z1, w, eps1, cond1)
    assert out1.shape == (B1, H + NZ)
    assert jnp.allclose(out1, ref1, atol=1e-5, rtol=1e-5), "mismatch (B=1)"

    # Case 2: a batched call exercising the (parallel) batch grid / 8-row tiles.
    B2 = 64
    z2 = jax.random.normal(k_z2, (B2, NZ), jnp.float32)
    eps2 = jax.random.normal(k_eps2, (B2, NZ), jnp.float32)
    cond2 = jax.random.normal(k_cond2, (B2, H), jnp.float32)
    out2 = jax.block_until_ready(mi_network_forward(z2, w_mu_t, w_lv_t, eps2, cond2))
    ref2 = _reference(z2, w, eps2, cond2)
    assert out2.shape == (B2, H + NZ)
    assert jnp.allclose(out2, ref2, atol=1e-5, rtol=1e-5), "mismatch (B=64)"

    print("KERNEL_OK")
</pallas_src>

<mosaic_0001>
module attributes {stable_mosaic.version = 11 : i64} {
  func.func @_mi_latent_kernel(%arg0: i32, %arg1: memref<1x32xf32, #tpu.memory_space<vmem>>, %arg2: memref<32x32xf32, #tpu.memory_space<vmem>>, %arg3: memref<32x32xf32, #tpu.memory_space<vmem>>, %arg4: memref<1x32xf32, #tpu.memory_space<vmem>>, %arg5: memref<1x32xf32, #tpu.memory_space<vmem>>) attributes {dimension_semantics = [#tpu.dimension_semantics<parallel>], iteration_bounds = array<i64: 1>, scalar_prefetch = 0 : i64, scratch_operands = 0 : i64, tpu.core_type = #tpu.core_type<tc>, window_params = [{transform_indices = @transform_0, window_bounds = array<i64: 1, 32>}, {pipeline_mode = #tpu.pipeline_mode<synchronous>, transform_indices = @transform_1, window_bounds = array<i64: 32, 32>}, {pipeline_mode = #tpu.pipeline_mode<synchronous>, transform_indices = @transform_2, window_bounds = array<i64: 32, 32>}, {transform_indices = @transform_3, window_bounds = array<i64: 1, 32>}, {transform_indices = @transform_4, window_bounds = array<i64: 1, 32>}]} {
    %c0 = arith.constant 0 : index
    %c0_0 = arith.constant 0 : index
    %0 = vector.load %arg1[%c0, %c0_0] : memref<1x32xf32, #tpu.memory_space<vmem>>, vector<1x32xf32>
    %c0_1 = arith.constant 0 : index
    %c0_2 = arith.constant 0 : index
    %1 = vector.load %arg2[%c0_1, %c0_2] : memref<32x32xf32, #tpu.memory_space<vmem>>, vector<32x32xf32>
    %cst = arith.constant dense<0.000000e+00> : vector<1x32xf32>
    %2 = tpu.matmul %0, %1, %cst {dimension_numbers = #tpu.dot_dimension_numbers<[1], [0], [0], [1], [0, 0, 1, 1], [], []>} : vector<1x32xf32>, vector<32x32xf32>, vector<1x32xf32> -> vector<1x32xf32>
    %c0_3 = arith.constant 0 : index
    %c0_4 = arith.constant 0 : index
    %3 = vector.load %arg3[%c0_3, %c0_4] : memref<32x32xf32, #tpu.memory_space<vmem>>, vector<32x32xf32>
    %cst_5 = arith.constant dense<0.000000e+00> : vector<1x32xf32>
    %4 = tpu.matmul %0, %3, %cst_5 {dimension_numbers = #tpu.dot_dimension_numbers<[1], [0], [0], [1], [0, 0, 1, 1], [], []>} : vector<1x32xf32>, vector<32x32xf32>, vector<1x32xf32> -> vector<1x32xf32>
    %cst_6 = arith.constant 5.000000e-01 : f32
    %5 = vector.broadcast %cst_6 : f32 to vector<1x32xf32>
    %6 = arith.mulf %5, %4 : vector<1x32xf32>
    %7 = math.exp %6 : vector<1x32xf32>
    %c0_7 = arith.constant 0 : index
    %c0_8 = arith.constant 0 : index
    %8 = vector.load %arg4[%c0_7, %c0_8] : memref<1x32xf32, #tpu.memory_space<vmem>>, vector<1x32xf32>
    %9 = arith.mulf %8, %7 : vector<1x32xf32>
    %10 = arith.addf %2, %9 : vector<1x32xf32>
    %c0_9 = arith.constant 0 : index
    %c0_10 = arith.constant 0 : index
    %11 = vector.load %arg5[%c0_9, %c0_10] : memref<1x32xf32, #tpu.memory_space<vmem>>, vector<1x32xf32>
    tpu.vector_store %arg5[%c0_9, %c0_10], %10 {strides = array<i32>} : memref<1x32xf32, #tpu.memory_space<vmem>>, vector<1x32xf32>,
    return
  }
  func.func @transform_0(%arg0: i32) -> (i32, i32) {
    %c0_i32 = arith.constant 0 : i32
    %c0_i32_0 = arith.constant 0 : i32
    return %arg0, %c0_i32 : i32, i32
  }
  func.func @transform_1(%arg0: i32) -> (i32, i32) {
    %c0_i32 = arith.constant 0 : i32
    %c0_i32_0 = arith.constant 0 : i32
    %c0_i32_1 = arith.constant 0 : i32
    return %c0_i32, %c0_i32_0 : i32, i32
  }
  func.func @transform_2(%arg0: i32) -> (i32, i32) {
    %c0_i32 = arith.constant 0 : i32
    %c0_i32_0 = arith.constant 0 : i32
    %c0_i32_1 = arith.constant 0 : i32
    return %c0_i32, %c0_i32_0 : i32, i32
  }
  func.func @transform_3(%arg0: i32) -> (i32, i32) {
    %c0_i32 = arith.constant 0 : i32
    %c0_i32_0 = arith.constant 0 : i32
    return %arg0, %c0_i32 : i32, i32
  }
  func.func @transform_4(%arg0: i32) -> (i32, i32) {
    %c0_i32 = arith.constant 0 : i32
    %c0_i32_0 = arith.constant 0 : i32
    return %arg0, %c0_i32 : i32, i32
  }
}

</mosaic_0001>

<llo_original>
// kernel: tpu_custom_call.1
$region0: #{tpu_custom_call.1}
  #allocation0 [shape = 'u32[]', space=smem, size = 0x4, offset = 0x4, fixed_abs, tag = 'smem constant byte address 0x4 - core index']
  #allocation1 [shape = 'u32[72,128]{1,0:T(1,128)}', space=vmem, size = 0x9000, scoped, tag = 'internal scratch']
  %s0 = inlined_call_operand.hbm [shape: f32[1,32], index: 0, kind: input, shape index: {}]
  %s1 = inlined_call_operand.hbm [shape: f32[32,32], index: 1, kind: input, shape index: {}]
  %s2 = inlined_call_operand.hbm [shape: f32[32,32], index: 2, kind: input, shape index: {}]
  %s3 = inlined_call_operand.vmem [shape: f32[1,32], index: 3, kind: input, shape index: {}]
  %s4 = inlined_call_operand.hbm [shape: f32[1,32], index: 4, kind: output, shape index: {}]
  %s5 = sld [smem:[#allocation0]]
  $region38: #{tpu_custom_call.1} parent=0
    _
  %s7 = ssub.s32 1, %s5
  %s8 = scalar_select 0, %s7, %s5
  $region1: #{tpu_custom_call.1} parent=0
    #allocation2 [shape = 'u8[512]{0}', space=vmem, size = 0x400, scoped, tag = 'input window, operand 0, single buffered']
    #allocation3 [shape = 's32[1]{0}', space=sflag, size = 0x4, scoped, tag = 'scoped memory for tpu_custom_call.1']
    #allocation4 [shape = 's32[1]{0}', space=sflag, size = 0x4, scoped, tag = 'scoped memory for tpu_custom_call.1']
    #allocation5 [shape = 'u8[16384]{0}', space=vmem, size = 0x4000, scoped, tag = 'input window, operand 1, single buffered']
    #allocation6 [shape = 's32[1]{0}', space=sflag, size = 0x4, scoped, tag = 'scoped memory for tpu_custom_call.1']
    #allocation7 [shape = 'u8[16384]{0}', space=vmem, size = 0x4000, scoped, tag = 'input window, operand 2, single buffered']
    #allocation8 [shape = 'u8[512]{0}', space=vmem, size = 0x400, scoped, tag = 'output window, operand 0, single buffered']
    %9 = vsyncpa [#allocation3], 0
    %10 = vsyncpa [#allocation6], 0
    %11 = vsyncpa [#allocation4], 0
    // Predicated region
    $region2: #{tpu_custom_call.1} parent=1 // pred_check
      _
    $region3: #{tpu_custom_call.1} parent=1 // pred_check_branch
      %13 = sbr.rel (0) target = $region5
    $region4: #{tpu_custom_call.1} parent=1 // pred_region
      %15 = vsyncadd [#allocation3], 0
      %s17 = sshll.u32 %s0, 4
      %s18 = int_to_ptr.hbm [resolvable:$true] %s17
      %s19 = sshll.u32 [#allocation2], 4
      %s20 = int_to_ptr.vmem [resolvable:$true] %s19
      %22 = dma.hbm_to_vmem [thread:$0]  %s18, 16, %s20, [#allocation3]
    $region5: #{tpu_custom_call.1} parent=1 // pred_fallthru
      _
    // Predicated region
    $region6: #{tpu_custom_call.1} parent=1 // pred_check
      _
    $region7: #{tpu_custom_call.1} parent=1 // pred_check_branch
      %24 = sbr.rel (0) target = $region9
    $region8: #{tpu_custom_call.1} parent=1 // pred_region
      %26 = vsyncadd [#allocation6], 0
      %s27 = sshll.u32 %s1, 4
      %s28 = int_to_ptr.hbm [resolvable:$true] %s27
      %s29 = sshll.u32 [#allocation5], 4
      %s30 = int_to_ptr.vmem [resolvable:$true] %s29
      %35 = dma.hbm_to_vmem [thread:$0]  %s28, 512, %s30, [#allocation6], 128, 128, 8
    $region9: #{tpu_custom_call.1} parent=1 // pred_fallthru
      _
    // Predicated region
    $region10: #{tpu_custom_call.1} parent=1 // pred_check
      _
    $region11: #{tpu_custom_call.1} parent=1 // pred_check_branch
      %37 = sbr.rel (0) target = $region13
    $region12: #{tpu_custom_call.1} parent=1 // pred_region
      %39 = vsyncadd [#allocation6], 0
      %s40 = sshll.u32 %s2, 4
      %s41 = int_to_ptr.hbm [resolvable:$true] %s40
      %s42 = sshll.u32 [#allocation7], 4
      %s43 = int_to_ptr.vmem [resolvable:$true] %s42
      %48 = dma.hbm_to_vmem [thread:$0]  %s41, 512, %s43, [#allocation6], 128, 128, 8
    $region13: #{tpu_custom_call.1} parent=1 // pred_fallthru
      _
    // Predicated region
    $region14: #{tpu_custom_call.1} parent=1 // pred_check
      _
    $region15: #{tpu_custom_call.1} parent=1 // pred_check_branch
      %50 = sbr.rel (0) target = $region17
    $region16: #{tpu_custom_call.1} parent=1 // pred_region
      _
    $region17: #{tpu_custom_call.1} parent=1 // pred_fallthru
      _
    // Predicated region
    $region18: #{tpu_custom_call.1} parent=1 // pred_check
      _
    $region19: #{tpu_custom_call.1} parent=1 // pred_check_branch
      %52 = sbr.rel (0) target = $region21
    $region20: #{tpu_custom_call.1} parent=1 // pred_region
      %54 = dma.done [#allocation3], 16
    $region21: #{tpu_custom_call.1} parent=1 // pred_fallthru
      _
    // Predicated region
    $region22: #{tpu_custom_call.1} parent=1 // pred_check
      _
    $region23: #{tpu_custom_call.1} parent=1 // pred_check_branch
      %56 = sbr.rel (0) target = $region25
    $region24: #{tpu_custom_call.1} parent=1 // pred_region
      %58 = dma.done [#allocation6], 512
    $region25: #{tpu_custom_call.1} parent=1 // pred_fallthru
      _
    // Predicated region
    $region26: #{tpu_custom_call.1} parent=1 // pred_check
      _
    $region27: #{tpu_custom_call.1} parent=1 // pred_check_branch
      %60 = sbr.rel (0) target = $region29
    $region28: #{tpu_custom_call.1} parent=1 // pred_region
      %62 = dma.done [#allocation6], 512
    $region29: #{tpu_custom_call.1} parent=1 // pred_fallthru
      _
    %v63 = vld [vmem:[#allocation2] sm:$0x1]
    %v64 = vld [vmem:[#allocation5] sm:$0xff]
    %v65 = vld [vmem:[#allocation5 + $0x8] sm:$0xff]
    %v66 = vld [vmem:[#allocation5 + $0x10] sm:$0xff]
    %v67 = vld [vmem:[#allocation5 + $0x18] sm:$0xff]
    %v68 = vld [vmem:[#allocation7] sm:$0xff]
    %v69 = vld [vmem:[#allocation7 + $0x8] sm:$0xff]
    %v70 = vld [vmem:[#allocation7 + $0x10] sm:$0xff]
    %v71 = vld [vmem:[#allocation7 + $0x18] sm:$0xff]
    %vm72 = vcmask 261120
    %v74 = vsel %vm72, %v63, 0
    %76 = vmatpush.msra.mxu0 0.0
    %77 = vmatpush.msra.mxu0 0.0
    %78 = vmatpush.msra.mxu0 0.0
    %79 = vmatpush.msra.mxu0 0.0
    %80 = vmatpush.msra.mxu0 0.0
    %81 = vmatpush.msra.mxu0 0.0
    %82 = vmatpush.msra.mxu0 0.0
    %83 = vmatpush.msra.mxu0 0.0
    %84 = vmatpush.msra.mxu0 0.0
    %85 = vmatpush.msra.mxu0 0.0
    %86 = vmatpush.msra.mxu0 0.0
    %87 = vmatpush.msra.mxu0 0.0
    %88 = vmatpush.msra.mxu0 %v71
    %89 = vmatpush.msra.mxu0 %v70
    %90 = vmatpush.msra.mxu0 %v69
    %91 = vmatpush.msra.mxu0 %v68
    %92 = vmatmul.f32.gmra.mxu0 %v74
    %v93 = vpop.f32.mrf.mxu0
    %v94 = vadd.f32 0.0, %v93
    %95 = vdwg.mxu0
    %v96 = vmul.f32 %v94, 0.5
    %v97 = vmul.f32 %v96, 1.442695
    %v98 = vpow.pop %v97
    %v99 = vld [vmem:[%s3] sm:$0x1]
    %v100 = vmul.f32 %v99, %v98
    %101 = vmatpush.msra.mxu0 0.0
    %102 = vmatpush.msra.mxu0 0.0
    %103 = vmatpush.msra.mxu0 0.0
    %104 = vmatpush.msra.mxu0 0.0
    %105 = vmatpush.msra.mxu0 0.0
    %106 = vmatpush.msra.mxu0 0.0
    %107 = vmatpush.msra.mxu0 0.0
    %108 = vmatpush.msra.mxu0 0.0
    %109 = vmatpush.msra.mxu0 0.0
    %110 = vmatpush.msra.mxu0 0.0
    %111 = vmatpush.msra.mxu0 0.0
    %112 = vmatpush.msra.mxu0 0.0
    %113 = vmatpush.msra.mxu0 %v67
    %114 = vmatpush.msra.mxu0 %v66
    %115 = vmatpush.msra.mxu0 %v65
    %116 = vmatpush.msra.mxu0 %v64
    %117 = vmatmul.f32.gmra.mxu0 %v74
    %v118 = vpop.f32.mrf.mxu0
    %v119 = vadd.f32 %v100, %v118
    %120 = vdwg.mxu0
    %vm121 = vcmask 253952
    %122 = vst.msk [vmem:[#allocation8] sm:$0x1] %vm121, %v119
    // Predicated region
    $region30: #{tpu_custom_call.1} parent=1 // pred_check
      _
    $region31: #{tpu_custom_call.1} parent=1 // pred_check_branch
      %124 = sbr.rel (0) target = $region33
    $region32: #{tpu_custom_call.1} parent=1 // pred_region
      %126 = vsyncadd [#allocation4], 0
      %s128 = sshll.u32 [#allocation8], 4
      %s129 = int_to_ptr.vmem [resolvable:$true] %s128
      %s130 = sshll.u32 %s4, 4
      %s131 = int_to_ptr.hbm [resolvable:$true] %s130
      %133 = dma.vmem_to_hbm [thread:$0]  %s129, 16, %s131, [#allocation4]
    $region33: #{tpu_custom_call.1} parent=1 // pred_fallthru
      _
    // Predicated region
    $region34: #{tpu_custom_call.1} parent=1 // pred_check
      _
    $region35: #{tpu_custom_call.1} parent=1 // pred_check_branch
      %135 = sbr.rel (0) target = $region37
    $region36: #{tpu_custom_call.1} parent=1 // pred_region
      %137 = dma.done [#allocation4], 16
    $region37: #{tpu_custom_call.1} parent=1 // pred_fallthru
      _
    %138 = vsyncpa [#allocation3], 1
    %139 = vsyncpa [#allocation6], 1
    %140 = vsyncpa [#allocation4], 1

</llo_original>
